<compile_context>
chip_gen: v6e
topology: v6e:2x2x1
jax: 0.10.0
libtpu: 0.0.40
codegen_flags: <defaults>
</compile_context>

<pallas_src>
import functools
from typing import Dict

import jax
import jax.numpy as jnp
from jax.experimental import pallas as pl
from jax.experimental.pallas import tpu as pltpu

LANE = 128
SUBLANE = 8
_VMEM_LIMIT = 32 * 1024 * 1024  # safe headroom on v5e/v6e (128 MiB) and v7x (64 MiB)

_PARAMS = pltpu.CompilerParams(
    dimension_semantics=("parallel",),   # independent row tiles; v7x megacore
    vmem_limit_bytes=_VMEM_LIMIT,
)


# ----------------------------------------------------------------------------
# Small helpers
# ----------------------------------------------------------------------------
def _round_up(n: int, m: int) -> int:
    return ((n + m - 1) // m) * m


def _choose_tiling(n: int):
    """Row padding + row-tile size.  Keeps the double-buffered (tm, Np) bf16
    adjacency strip around <= 4 MiB so the kernel fits the default scoped VMEM
    on v5e (16 MiB), v6e (32 MiB) and v7x (32/64 MiB)."""
    np8 = _round_up(max(n, SUBLANE), SUBLANE)
    tm = min(256, np8, max(SUBLANE, (2 * 1024 * 1024) // (np8 * 2)))
    tm = max(SUBLANE, (tm // SUBLANE) * SUBLANE)
    return _round_up(np8, tm), tm


def _pad2d(x, rows, cols, dtype):
    out = jnp.zeros((rows, cols), dtype)
    return out.at[: x.shape[0], : x.shape[1]].set(x.astype(dtype))


def _resident(shape):
    # constant index_map -> stays VMEM-resident across grid steps (no re-DMA)
    return pl.BlockSpec(shape, lambda i: (0,) * len(shape))


def _row_tiled(tm, cols):
    return pl.BlockSpec((tm, cols), lambda i: (i, 0))


# ----------------------------------------------------------------------------
# Kernels
# ----------------------------------------------------------------------------
def _content_compute(adj_ref, feat_ref, w_in_ref, b_in_ref, w_msg_ref, r0, tm,
                     disable_message_passing, disable_residual):
    """ContentEncoder body for one row tile (all math f32, MXU operands bf16)."""
    x_tile = feat_ref[pl.ds(r0, tm), :]                                # bf16 (tm, Fp)
    h0_t = jnp.dot(x_tile, w_in_ref[...],
                   preferred_element_type=jnp.float32) + b_in_ref[...]
    if disable_message_passing:
        h = jnp.maximum(h0_t, 0.0)
    else:
        # Recompute H0 for all nodes (cheap: Np x Fp x d MACs) so the tile's
        # neighbor aggregation adj_tile @ H0 stays local to this grid step
        # (no cross-tile state -> safe under "parallel" grid semantics).
        h0_all = jnp.dot(feat_ref[...], w_in_ref[...],
                         preferred_element_type=jnp.float32) + b_in_ref[...]
        m = jnp.dot(adj_ref[...], h0_all.astype(jnp.bfloat16),
                    preferred_element_type=jnp.float32)
        h = jnp.maximum(
            h0_t + jnp.dot(m.astype(jnp.bfloat16), w_msg_ref[...],
                           preferred_element_type=jnp.float32),
            0.0)
    if not disable_residual:
        # TODO(synk): residual form is synthetic (original ContentEncoder
        # internals not provided); kept identical to the previous port.
        h = h + h0_t
    return h


def _content_kernel(adj_ref, feat_ref, w_in_ref, b_in_ref, w_msg_ref, o_ref, *,
                    tm, disable_message_passing, disable_residual):
    r0 = pl.multiple_of(pl.program_id(0) * tm, tm)
    h = _content_compute(adj_ref, feat_ref, w_in_ref, b_in_ref, w_msg_ref,
                         r0, tm, disable_message_passing, disable_residual)
    o_ref[...] = h.astype(o_ref.dtype)


def content_encoder_forward(adj, feat, w_in, b_in, w_msg, *, tm,
                            disable_message_passing, disable_residual):
    np_rows = feat.shape[0]
    d = w_in.shape[1]
    kern = functools.partial(
        _content_kernel, tm=tm,
        disable_message_passing=disable_message_passing,
        disable_residual=disable_residual)
    return pl.pallas_call(
        kern,
        grid=(np_rows // tm,),
        in_specs=[_row_tiled(tm, np_rows),      # adj row strip
                  _resident(feat.shape),        # full node features (resident)
                  _resident(w_in.shape), _resident(b_in.shape),
                  _resident(w_msg.shape)],
        out_specs=_row_tiled(tm, d),
        out_shape=jax.ShapeDtypeStruct((np_rows, d), jnp.float32),
        compiler_params=_PARAMS,
    )(adj, feat, w_in, b_in, w_msg)


def _mlp2_kernel(x_ref, w1_ref, b1_ref, w2_ref, b2_ref, o_ref):
    """Fused Linear -> ReLU -> Linear over one row tile (bf16 MXU, f32 VPU)."""
    h = jnp.dot(x_ref[...], w1_ref[...],
                preferred_element_type=jnp.float32) + b1_ref[...]
    h = jnp.maximum(h, 0.0)
    y = jnp.dot(h.astype(jnp.bfloat16), w2_ref[...],
                preferred_element_type=jnp.float32) + b2_ref[...]
    o_ref[...] = y.astype(o_ref.dtype)


def mlp2(x, w1, b1, w2, b2, *, tm):
    np_rows, d_in = x.shape
    d_out = w2.shape[1]
    return pl.pallas_call(
        _mlp2_kernel,
        grid=(np_rows // tm,),
        in_specs=[_row_tiled(tm, d_in),
                  _resident(w1.shape), _resident(b1.shape),
                  _resident(w2.shape), _resident(b2.shape)],
        out_specs=_row_tiled(tm, d_out),
        out_shape=jax.ShapeDtypeStruct((np_rows, d_out), jnp.float32),
        compiler_params=_PARAMS,
    )(x, w1, b1, w2, b2)


def _fused_kernel(adj_ref, feat_ref, style_ref,
                  w_in_ref, b_in_ref, w_msg_ref,
                  se_w1_ref, se_b1_ref, se_w2_ref, se_b2_ref,
                  sd_w1_ref, sd_b1_ref, sd_w2_ref, sd_b2_ref,
                  o_ref, *, tm, disable_message_passing, disable_residual,
                  has_style_encoder):
    """Single kernel: ContentEncoder + StyleEncoder + add + StyleDecoder.
    All (tm, d) intermediates live in vregs/VMEM; only the 128-lane padded
    prediction tile is written back to HBM."""
    r0 = pl.multiple_of(pl.program_id(0) * tm, tm)

    content = _content_compute(adj_ref, feat_ref, w_in_ref, b_in_ref, w_msg_ref,
                               r0, tm, disable_message_passing, disable_residual)

    if has_style_encoder:
        sh = jnp.maximum(
            jnp.dot(style_ref[...], se_w1_ref[...],
                    preferred_element_type=jnp.float32) + se_b1_ref[...], 0.0)
        style = jnp.dot(sh.astype(jnp.bfloat16), se_w2_ref[...],
                        preferred_element_type=jnp.float32) + se_b2_ref[...]
        z = content + style
    else:
        z = content

    d1 = jnp.maximum(
        jnp.dot(z.astype(jnp.bfloat16), sd_w1_ref[...],
                preferred_element_type=jnp.float32) + sd_b1_ref[...], 0.0)
    y = jnp.dot(d1.astype(jnp.bfloat16), sd_w2_ref[...],
                preferred_element_type=jnp.float32) + sd_b2_ref[...]
    o_ref[...] = y.astype(o_ref.dtype)


def fused_forward(adj, feat, style, ce, se, sd, *, tm,
                  disable_message_passing, disable_residual, has_style_encoder):
    np_rows = feat.shape[0]
    out_dim = sd[2].shape[1]
    kern = functools.partial(
        _fused_kernel, tm=tm,
        disable_message_passing=disable_message_passing,
        disable_residual=disable_residual,
        has_style_encoder=has_style_encoder)
    args = (adj, feat, style) + tuple(ce) + tuple(se) + tuple(sd)
    in_specs = ([_row_tiled(tm, np_rows),          # adj row strip
                 _resident(feat.shape),            # full node features
                 _row_tiled(tm, style.shape[1])]   # style features row tile
                + [_resident(a.shape) for a in tuple(ce) + tuple(se) + tuple(sd)])
    return pl.pallas_call(
        kern,
        grid=(np_rows // tm,),
        in_specs=in_specs,
        out_specs=_row_tiled(tm, out_dim),
        out_shape=jax.ShapeDtypeStruct((np_rows, out_dim), jnp.float32),
        compiler_params=_PARAMS,
    )(*args)


# ----------------------------------------------------------------------------
# Parameter init (deterministic, PyTorch nn.Linear-style uniform bounds),
# zero-padded to lane-dense shapes.  Zero padding keeps all padded lanes
# exactly zero through every layer, so slicing in the wrapper is exact.
# ----------------------------------------------------------------------------
def _init_linear_padded(key, fan_in, fan_out, pad_in, pad_out, with_bias=True):
    kw, kb = jax.random.split(key)
    bound = 1.0 / (fan_in ** 0.5)
    w = jax.random.uniform(kw, (fan_in, fan_out), jnp.float32, -bound, bound)
    w_p = jnp.zeros((pad_in, pad_out), jnp.float32).at[:fan_in, :fan_out].set(w)
    w_p = w_p.astype(jnp.bfloat16)            # MXU operand dtype
    if not with_bias:
        return w_p
    b = jax.random.uniform(kb, (1, fan_out), jnp.float32, -bound, bound)
    b_p = jnp.zeros((1, pad_out), jnp.float32).at[:, :fan_out].set(b)
    return w_p, b_p                            # bias stays f32 (f32 VPU adds)


# ----------------------------------------------------------------------------
# BaseModel (JAX/Pallas port)
# ----------------------------------------------------------------------------
class BaseModel:
    STYLE_IN = 3 + 3 + 1      # text_color(3) + bg_color(3) + has_text(1)
    STYLE_OUT = 3 + 3 + 1     # predicted text_color, bg_color, has_text logit

    def __init__(self, d_model: int, has_style_encoder: bool, pred_residual: bool,
                 node_feat_dim: int = 16,
                 disable_message_passing: bool = False,
                 disable_residual: bool = False,
                 seed: int = 0):
        self.d_model = d_model
        # TODO(synk): pred_residual=True semantics (adding predicted deltas onto
        # input colors) depend on StyleDecoder internals not provided here.
        self.pred_residual = pred_residual
        self.disable_message_passing = disable_message_passing
        self.disable_residual = disable_residual
        self.has_style_encoder = has_style_encoder

        # lane-dense padded dims (128-lane vregs / MXU tiles)
        self.d_pad = _round_up(d_model, LANE)
        self.feat_pad = _round_up(node_feat_dim, LANE)
        self.style_in_pad = _round_up(self.STYLE_IN, LANE)
        self.style_out_pad = _round_up(self.STYLE_OUT, LANE)

        key = jax.random.PRNGKey(seed)
        k = jax.random.split(key, 6)

        # ContentEncoder params (dense-adjacency GNN layer)
        self.ce_w_in, self.ce_b_in = _init_linear_padded(
            k[0], node_feat_dim, d_model, self.feat_pad, self.d_pad)
        self.ce_w_msg = _init_linear_padded(
            k[1], d_model, d_model, self.d_pad, self.d_pad, with_bias=False)

        # StyleEncoder params (optional)
        if has_style_encoder:
            self.se_w1, self.se_b1 = _init_linear_padded(
                k[2], self.STYLE_IN, d_model, self.style_in_pad, self.d_pad)
            self.se_w2, self.se_b2 = _init_linear_padded(
                k[3], d_model, d_model, self.d_pad, self.d_pad)
        else:
            self.se_w1 = self.se_b1 = self.se_w2 = self.se_b2 = None

        # StyleDecoder params (output padded to 128 lanes; sliced to 7 outside)
        self.sd_w1, self.sd_b1 = _init_linear_padded(
            k[4], d_model, d_model, self.d_pad, self.d_pad)
        self.sd_w2, self.sd_b2 = _init_linear_padded(
            k[5], d_model, self.STYLE_OUT, self.d_pad, self.style_out_pad)

    # ---- encode_content: dgl.DGLGraph represented as (adj, node_feat) ----
    def encode_content(self, adj: jnp.ndarray, node_feat: jnp.ndarray) -> jnp.ndarray:
        n = node_feat.shape[0]
        np_rows, tm = _choose_tiling(n)
        adj_p = _pad2d(adj, np_rows, np_rows, jnp.bfloat16)
        feat_p = _pad2d(node_feat, np_rows, self.feat_pad, jnp.bfloat16)
        h = content_encoder_forward(
            adj_p, feat_p, self.ce_w_in, self.ce_b_in, self.ce_w_msg, tm=tm,
            disable_message_passing=self.disable_message_passing,
            disable_residual=self.disable_residual)
        return h[:n, : self.d_model]

    def _style_features(self, text_color, bg_color, has_text, np_rows):
        n = text_color.shape[0]
        feat = jnp.zeros((np_rows, self.style_in_pad), jnp.float32)
        feat = feat.at[:n, 0:3].set(text_color.astype(jnp.float32))
        feat = feat.at[:n, 3:6].set(bg_color.astype(jnp.float32))
        feat = feat.at[:n, 6].set(has_text.astype(jnp.float32))
        return feat.astype(jnp.bfloat16)     # lane-dense (Np, 128) kernel input

    def encode_style(self, text_color, bg_color, has_text, **kwargs) -> jnp.ndarray:
        assert self.has_style_encoder, "This model does not have the style encoder."
        n = text_color.shape[0]
        np_rows, tm = _choose_tiling(n)
        x = self._style_features(text_color, bg_color, has_text, np_rows)
        y = mlp2(x, self.se_w1, self.se_b1, self.se_w2, self.se_b2, tm=tm)
        return y[:n, : self.d_model]

    @staticmethod
    def _split_styles(y) -> Dict[str, jnp.ndarray]:
        return {"text_color": y[:, 0:3],
                "bg_color": y[:, 3:6],
                "has_text": y[:, 6:7]}

    def decode_style(self, x: jnp.ndarray) -> Dict[str, jnp.ndarray]:
        n = x.shape[0]
        np_rows, tm = _choose_tiling(n)
        x_p = _pad2d(x, np_rows, self.d_pad, jnp.bfloat16)
        y = mlp2(x_p, self.sd_w1, self.sd_b1, self.sd_w2, self.sd_b2, tm=tm)
        return self._split_styles(y[:n])

    def encode_and_decode(self, adj, node_feat, text_color=None, bg_color=None,
                          has_text=None) -> Dict[str, jnp.ndarray]:
        """Fused single pallas_call: encode_content + encode_style + add +
        decode_style with all intermediates kept on-chip."""
        n = node_feat.shape[0]
        np_rows, tm = _choose_tiling(n)
        adj_p = _pad2d(adj, np_rows, np_rows, jnp.bfloat16)
        feat_p = _pad2d(node_feat, np_rows, self.feat_pad, jnp.bfloat16)
        if self.has_style_encoder:
            style_p = self._style_features(text_color, bg_color, has_text, np_rows)
            se = (self.se_w1, self.se_b1, self.se_w2, self.se_b2)
        else:
            style_p = jnp.zeros((np_rows, self.style_in_pad), jnp.bfloat16)
            se = (jnp.zeros((self.style_in_pad, self.d_pad), jnp.bfloat16),
                  jnp.zeros((1, self.d_pad), jnp.float32),
                  jnp.zeros((self.d_pad, self.d_pad), jnp.bfloat16),
                  jnp.zeros((1, self.d_pad), jnp.float32))
        y = fused_forward(
            adj_p, feat_p, style_p,
            (self.ce_w_in, self.ce_b_in, self.ce_w_msg), se,
            (self.sd_w1, self.sd_b1, self.sd_w2, self.sd_b2),
            tm=tm,
            disable_message_passing=self.disable_message_passing,
            disable_residual=self.disable_residual,
            has_style_encoder=self.has_style_encoder)
        return self._split_styles(y[:n])

    def forward(self, *args, **kwargs):
        """Forward method for loss calculation (training)."""
        raise NotImplementedError

    def generate(self, *args, **kwargs):
        """Generate colors for testing."""
        raise NotImplementedError


# ----------------------------------------------------------------------------
# Smoke test
# ----------------------------------------------------------------------------
if __name__ == "__main__":
    d_model = 32
    n_nodes = 8
    node_feat_dim = 16

    key = jax.random.PRNGKey(0)
    k_adj, k_feat, k_tc, k_bg, k_ht = jax.random.split(key, 5)

    # synthetic "graph": dense 0/1 adjacency + node features
    adj = (jax.random.uniform(k_adj, (n_nodes, n_nodes)) > 0.5).astype(jnp.float32)
    node_feat = jax.random.normal(k_feat, (n_nodes, node_feat_dim), jnp.float32)

    # synthetic style inputs
    text_color = jax.random.uniform(k_tc, (n_nodes, 3), jnp.float32)
    bg_color = jax.random.uniform(k_bg, (n_nodes, 3), jnp.float32)
    has_text = (jax.random.uniform(k_ht, (n_nodes,)) > 0.5)

    model = BaseModel(d_model=d_model, has_style_encoder=True, pred_residual=False,
                      node_feat_dim=node_feat_dim)

    # module-faithful composed path (three pallas_calls)
    content = model.encode_content(adj, node_feat)               # (N, d_model)
    style = model.encode_style(text_color, bg_color, has_text)   # (N, d_model)
    preds = model.decode_style(content + style)                  # dict

    # fused single-kernel path
    preds_fused = model.encode_and_decode(adj, node_feat, text_color, bg_color,
                                          has_text)

    jax.block_until_ready((content, style, preds, preds_fused))

    assert content.shape == (n_nodes, d_model)
    assert style.shape == (n_nodes, d_model)
    assert preds["text_color"].shape == (n_nodes, 3)
    assert preds["bg_color"].shape == (n_nodes, 3)
    assert preds["has_text"].shape == (n_nodes, 1)
    for name in ("text_color", "bg_color", "has_text"):
        assert preds_fused[name].shape == preds[name].shape
        assert jnp.allclose(preds_fused[name], preds[name], rtol=1e-2, atol=1e-2), name

    print("KERNEL_OK")
</pallas_src>

<mosaic_0001>
module attributes {stable_mosaic.version = 11 : i64} {
  func.func @_content_kernel(%arg0: i32, %arg1: memref<8x8xbf16, #tpu.memory_space<vmem>>, %arg2: memref<8x128xbf16, #tpu.memory_space<vmem>>, %arg3: memref<128x128xbf16, #tpu.memory_space<vmem>>, %arg4: memref<1x128xf32, #tpu.memory_space<vmem>>, %arg5: memref<128x128xbf16, #tpu.memory_space<vmem>>, %arg6: memref<8x128xf32, #tpu.memory_space<vmem>>) attributes {dimension_semantics = [#tpu.dimension_semantics<parallel>], iteration_bounds = array<i64: 1>, scalar_prefetch = 0 : i64, scratch_operands = 0 : i64, tpu.core_type = #tpu.core_type<tc>, window_params = [{transform_indices = @transform_0, window_bounds = array<i64: 8, 8>}, {pipeline_mode = #tpu.pipeline_mode<synchronous>, transform_indices = @transform_1, window_bounds = array<i64: 8, 128>}, {pipeline_mode = #tpu.pipeline_mode<synchronous>, transform_indices = @transform_2, window_bounds = array<i64: 128, 128>}, {pipeline_mode = #tpu.pipeline_mode<synchronous>, transform_indices = @transform_3, window_bounds = array<i64: 1, 128>}, {pipeline_mode = #tpu.pipeline_mode<synchronous>, transform_indices = @transform_4, window_bounds = array<i64: 128, 128>}, {transform_indices = @transform_5, window_bounds = array<i64: 8, 128>}]} {
    %c8_i32 = arith.constant 8 : i32
    %0 = arith.muli %arg0, %c8_i32 : i32
    %1 = tpu.assume_multiple %0, 8 : i32
    %2 = arith.index_cast %1 : i32 to index
    %c0 = arith.constant 0 : index
    %3 = vector.load %arg2[%2, %c0] : memref<8x128xbf16, #tpu.memory_space<vmem>>, vector<8x128xbf16>
    %c0_0 = arith.constant 0 : index
    %c0_1 = arith.constant 0 : index
    %4 = vector.load %arg3[%c0_0, %c0_1] : memref<128x128xbf16, #tpu.memory_space<vmem>>, vector<128x128xbf16>
    %cst = arith.constant dense<0.000000e+00> : vector<8x128xf32>
    %5 = tpu.matmul %3, %4, %cst {dimension_numbers = #tpu.dot_dimension_numbers<[1], [0], [0], [1], [0, 0, 1, 1], [], []>} : vector<8x128xbf16>, vector<128x128xbf16>, vector<8x128xf32> -> vector<8x128xf32>
    %c0_2 = arith.constant 0 : index
    %c0_3 = arith.constant 0 : index
    %6 = vector.load %arg4[%c0_2, %c0_3] : memref<1x128xf32, #tpu.memory_space<vmem>>, vector<1x128xf32>
    %7 = vector.broadcast %6 : vector<1x128xf32> to vector<8x128xf32>
    %8 = arith.addf %5, %7 : vector<8x128xf32>
    %c0_4 = arith.constant 0 : index
    %c0_5 = arith.constant 0 : index
    %9 = vector.load %arg2[%c0_4, %c0_5] : memref<8x128xbf16, #tpu.memory_space<vmem>>, vector<8x128xbf16>
    %c0_6 = arith.constant 0 : index
    %c0_7 = arith.constant 0 : index
    %10 = vector.load %arg3[%c0_6, %c0_7] : memref<128x128xbf16, #tpu.memory_space<vmem>>, vector<128x128xbf16>
    %cst_8 = arith.constant dense<0.000000e+00> : vector<8x128xf32>
    %11 = tpu.matmul %9, %10, %cst_8 {dimension_numbers = #tpu.dot_dimension_numbers<[1], [0], [0], [1], [0, 0, 1, 1], [], []>} : vector<8x128xbf16>, vector<128x128xbf16>, vector<8x128xf32> -> vector<8x128xf32>
    %c0_9 = arith.constant 0 : index
    %c0_10 = arith.constant 0 : index
    %12 = vector.load %arg4[%c0_9, %c0_10] : memref<1x128xf32, #tpu.memory_space<vmem>>, vector<1x128xf32>
    %13 = vector.broadcast %12 : vector<1x128xf32> to vector<8x128xf32>
    %14 = arith.addf %11, %13 : vector<8x128xf32>
    %c0_11 = arith.constant 0 : index
    %c0_12 = arith.constant 0 : index
    %15 = vector.load %arg1[%c0_11, %c0_12] : memref<8x8xbf16, #tpu.memory_space<vmem>>, vector<8x8xbf16>
    %16 = arith.truncf %14 : vector<8x128xf32> to vector<8x128xbf16>
    %cst_13 = arith.constant dense<0.000000e+00> : vector<8x128xf32>
    %17 = tpu.matmul %15, %16, %cst_13 {dimension_numbers = #tpu.dot_dimension_numbers<[1], [0], [0], [1], [0, 0, 1, 1], [], []>} : vector<8x8xbf16>, vector<8x128xbf16>, vector<8x128xf32> -> vector<8x128xf32>
    %18 = arith.truncf %17 : vector<8x128xf32> to vector<8x128xbf16>
    %c0_14 = arith.constant 0 : index
    %c0_15 = arith.constant 0 : index
    %19 = vector.load %arg5[%c0_14, %c0_15] : memref<128x128xbf16, #tpu.memory_space<vmem>>, vector<128x128xbf16>
    %cst_16 = arith.constant dense<0.000000e+00> : vector<8x128xf32>
    %20 = tpu.matmul %18, %19, %cst_16 {dimension_numbers = #tpu.dot_dimension_numbers<[1], [0], [0], [1], [0, 0, 1, 1], [], []>} : vector<8x128xbf16>, vector<128x128xbf16>, vector<8x128xf32> -> vector<8x128xf32>
    %21 = arith.addf %8, %20 : vector<8x128xf32>
    %cst_17 = arith.constant 0.000000e+00 : f32
    %22 = vector.broadcast %cst_17 : f32 to vector<8x128xf32>
    %23 = arith.maximumf %21, %22 : vector<8x128xf32>
    %24 = arith.addf %23, %8 : vector<8x128xf32>
    %c0_18 = arith.constant 0 : index
    %c0_19 = arith.constant 0 : index
    %25 = vector.load %arg6[%c0_18, %c0_19] : memref<8x128xf32, #tpu.memory_space<vmem>>, vector<8x128xf32>
    tpu.vector_store %arg6[%c0_18, %c0_19], %24 {strides = array<i32>} : memref<8x128xf32, #tpu.memory_space<vmem>>, vector<8x128xf32>,
    return
  }
  func.func @transform_0(%arg0: i32) -> (i32, i32) {
    %c0_i32 = arith.constant 0 : i32
    %c0_i32_0 = arith.constant 0 : i32
    return %arg0, %c0_i32 : i32, i32
  }
  func.func @transform_1(%arg0: i32) -> (i32, i32) {
    %c0_i32 = arith.constant 0 : i32
    %c0_i32_0 = arith.constant 0 : i32
    %c0_i32_1 = arith.constant 0 : i32
    return %c0_i32, %c0_i32_0 : i32, i32
  }
  func.func @transform_2(%arg0: i32) -> (i32, i32) {
    %c0_i32 = arith.constant 0 : i32
    %c0_i32_0 = arith.constant 0 : i32
    %c0_i32_1 = arith.constant 0 : i32
    return %c0_i32, %c0_i32_0 : i32, i32
  }
  func.func @transform_3(%arg0: i32) -> (i32, i32) {
    %c0_i32 = arith.constant 0 : i32
    %c0_i32_0 = arith.constant 0 : i32
    %c0_i32_1 = arith.constant 0 : i32
    return %c0_i32, %c0_i32_0 : i32, i32
  }
  func.func @transform_4(%arg0: i32) -> (i32, i32) {
    %c0_i32 = arith.constant 0 : i32
    %c0_i32_0 = arith.constant 0 : i32
    %c0_i32_1 = arith.constant 0 : i32
    return %c0_i32, %c0_i32_0 : i32, i32
  }
  func.func @transform_5(%arg0: i32) -> (i32, i32) {
    %c0_i32 = arith.constant 0 : i32
    %c0_i32_0 = arith.constant 0 : i32
    return %arg0, %c0_i32 : i32, i32
  }
}

</mosaic_0001>

<llo_original>
// kernel: tpu_custom_call.1
$region0: #{tpu_custom_call.1}
  #allocation0 [shape = 'u32[]', space=smem, size = 0x4, offset = 0x4, fixed_abs, tag = 'smem constant byte address 0x4 - core index']
  #allocation1 [shape = 'u32[144,128]{1,0:T(1,128)}', space=vmem, size = 0x12000, scoped, tag = 'internal scratch']
  %s0 = inlined_call_operand.hbm [shape: bf16[8,8], index: 0, kind: input, shape index: {}]
  %s1 = inlined_call_operand.hbm [shape: bf16[8,128], index: 1, kind: input, shape index: {}]
  %s2 = inlined_call_operand.hbm [shape: bf16[128,128], index: 2, kind: input, shape index: {}]
  %s3 = inlined_call_operand.vmem [shape: f32[1,128], index: 3, kind: input, shape index: {}]
  %s4 = inlined_call_operand.hbm [shape: bf16[128,128], index: 4, kind: input, shape index: {}]
  %s5 = inlined_call_operand.hbm [shape: f32[8,128], index: 5, kind: output, shape index: {}]
  %s6 = sld [smem:[#allocation0]]
  $region46: #{tpu_custom_call.1} parent=0
    _
  %s8 = ssub.s32 1, %s6
  %s9 = scalar_select 0, %s8, %s6
  $region1: #{tpu_custom_call.1} parent=0
    #allocation2 [shape = 'u8[2048]{0}', space=vmem, size = 0x800, scoped, tag = 'input window, operand 0, single buffered']
    #allocation3 [shape = 's32[1]{0}', space=sflag, size = 0x4, scoped, tag = 'scoped memory for tpu_custom_call.1']
    #allocation4 [shape = 's32[1]{0}', space=sflag, size = 0x4, scoped, tag = 'scoped memory for tpu_custom_call.1']
    #allocation5 [shape = 'u8[2048]{0}', space=vmem, size = 0x800, scoped, tag = 'input window, operand 1, single buffered']
    #allocation6 [shape = 's32[1]{0}', space=sflag, size = 0x4, scoped, tag = 'scoped memory for tpu_custom_call.1']
    #allocation7 [shape = 'u8[32768]{0}', space=vmem, size = 0x8000, scoped, tag = 'input window, operand 2, single buffered']
    #allocation8 [shape = 'u8[32768]{0}', space=vmem, size = 0x8000, scoped, tag = 'input window, operand 4, single buffered']
    #allocation9 [shape = 's32[1]{0}', space=sflag, size = 0x4, scoped, tag = 'scoped memory for tpu_custom_call.1']
    #allocation10 [shape = 'u8[4096]{0}', space=vmem, size = 0x1000, scoped, tag = 'output window, operand 0, single buffered']
    %10 = vsyncpa [#allocation3], 0
    %11 = vsyncpa [#allocation6], 0
    %12 = vsyncpa [#allocation9], 0
    %13 = vsyncpa [#allocation4], 0
    // Predicated region
    $region2: #{tpu_custom_call.1} parent=1 // pred_check
      _
    $region3: #{tpu_custom_call.1} parent=1 // pred_check_branch
      %15 = sbr.rel (0) target = $region5
    $region4: #{tpu_custom_call.1} parent=1 // pred_region
      %s17 = ssub.s32 64, 64
      %18 = vsyncadd [#allocation3], %s17
      %s20 = sshll.u32 [#allocation2], 4
      %s21 = int_to_ptr.vmem [resolvable:$true] %s20
      %23 = dma.hbm_to_vmem [thread:$0]  %s0, 64, %s21, [#allocation3]
    $region5: #{tpu_custom_call.1} parent=1 // pred_fallthru
      _
    // Predicated region
    $region6: #{tpu_custom_call.1} parent=1 // pred_check
      _
    $region7: #{tpu_custom_call.1} parent=1 // pred_check_branch
      %25 = sbr.rel (0) target = $region9
    $region8: #{tpu_custom_call.1} parent=1 // pred_region
      %s27 = ssub.s32 64, 64
      %28 = vsyncadd [#allocation6], %s27
      %s30 = sshll.u32 [#allocation5], 4
      %s31 = int_to_ptr.vmem [resolvable:$true] %s30
      %33 = dma.hbm_to_vmem [thread:$0]  %s1, 64, %s31, [#allocation6]
    $region9: #{tpu_custom_call.1} parent=1 // pred_fallthru
      _
    // Predicated region
    $region10: #{tpu_custom_call.1} parent=1 // pred_check
      _
    $region11: #{tpu_custom_call.1} parent=1 // pred_check_branch
      %35 = sbr.rel (0) target = $region13
    $region12: #{tpu_custom_call.1} parent=1 // pred_region
      %s37 = ssub.s32 1024, 1024
      %38 = vsyncadd [#allocation6], %s37
      %s39 = sshll.u32 [#allocation7], 4
      %s40 = int_to_ptr.vmem [resolvable:$true] %s39
      %45 = dma.hbm_to_vmem [thread:$0]  %s2, 1024, %s40, [#allocation6], 64, 64, 4
    $region13: #{tpu_custom_call.1} parent=1 // pred_fallthru
      _
    // Predicated region
    $region14: #{tpu_custom_call.1} parent=1 // pred_check
      _
    $region15: #{tpu_custom_call.1} parent=1 // pred_check_branch
      %47 = sbr.rel (0) target = $region17
    $region16: #{tpu_custom_call.1} parent=1 // pred_region
      _
    $region17: #{tpu_custom_call.1} parent=1 // pred_fallthru
      _
    // Predicated region
    $region18: #{tpu_custom_call.1} parent=1 // pred_check
      _
    $region19: #{tpu_custom_call.1} parent=1 // pred_check_branch
      %49 = sbr.rel (0) target = $region21
    $region20: #{tpu_custom_call.1} parent=1 // pred_region
      %s51 = ssub.s32 1024, 1024
      %52 = vsyncadd [#allocation9], %s51
      %s53 = sshll.u32 [#allocation8], 4
      %s54 = int_to_ptr.vmem [resolvable:$true] %s53
      %59 = dma.hbm_to_vmem [thread:$0]  %s4, 1024, %s54, [#allocation9], 64, 64, 4
    $region21: #{tpu_custom_call.1} parent=1 // pred_fallthru
      _
    // Predicated region
    $region22: #{tpu_custom_call.1} parent=1 // pred_check
      _
    $region23: #{tpu_custom_call.1} parent=1 // pred_check_branch
      %61 = sbr.rel (0) target = $region25
    $region24: #{tpu_custom_call.1} parent=1 // pred_region
      %62 = dma.done [#allocation3], 64
    $region25: #{tpu_custom_call.1} parent=1 // pred_fallthru
      _
    // Predicated region
    $region26: #{tpu_custom_call.1} parent=1 // pred_check
      _
    $region27: #{tpu_custom_call.1} parent=1 // pred_check_branch
      %64 = sbr.rel (0) target = $region29
    $region28: #{tpu_custom_call.1} parent=1 // pred_region
      %65 = dma.done [#allocation6], 64
    $region29: #{tpu_custom_call.1} parent=1 // pred_fallthru
      _
    // Predicated region
    $region30: #{tpu_custom_call.1} parent=1 // pred_check
      _
    $region31: #{tpu_custom_call.1} parent=1 // pred_check_branch
      %67 = sbr.rel (0) target = $region33
    $region32: #{tpu_custom_call.1} parent=1 // pred_region
      %68 = dma.done [#allocation6], 1024
    $region33: #{tpu_custom_call.1} parent=1 // pred_fallthru
      _
    // Predicated region
    $region34: #{tpu_custom_call.1} parent=1 // pred_check
      _
    $region35: #{tpu_custom_call.1} parent=1 // pred_check_branch
      %70 = sbr.rel (0) target = $region37
    $region36: #{tpu_custom_call.1} parent=1 // pred_region
      %71 = dma.done [#allocation9], 1024
    $region37: #{tpu_custom_call.1} parent=1 // pred_fallthru
      _
    %s73 = smul.u32 0, 8
    %s74 = sshra.s32 %s73, 3
    %s75 = sand.u32 %s73, 7
    %s76 = smul.addr %s74, 4
    %s77 = scalar_lea.vmem [#allocation5], %s76
    %v78 = vld [vmem:[%s77] sm:$0xf]
    %v79 = vld [vmem:[#allocation7] sm:$0xf]
    %v80 = vld [vmem:[#allocation7 + $0x4] sm:$0xf]
    %v81 = vld [vmem:[#allocation7 + $0x8] sm:$0xf]
    %v82 = vld [vmem:[#allocation7 + $0xc] sm:$0xf]
    %v83 = vld [vmem:[#allocation7 + $0x10] sm:$0xf]
    %v84 = vld [vmem:[#allocation7 + $0x14] sm:$0xf]
    %v85 = vld [vmem:[#allocation7 + $0x18] sm:$0xf]
    %v86 = vld [vmem:[#allocation7 + $0x1c] sm:$0xf]
    %v87 = vld [vmem:[#allocation7 + $0x20] sm:$0xf]
    %v88 = vld [vmem:[#allocation7 + $0x24] sm:$0xf]
    %v89 = vld [vmem:[#allocation7 + $0x28] sm:$0xf]
    %v90 = vld [vmem:[#allocation7 + $0x2c] sm:$0xf]
    %v91 = vld [vmem:[#allocation7 + $0x30] sm:$0xf]
    %v92 = vld [vmem:[#allocation7 + $0x34] sm:$0xf]
    %v93 = vld [vmem:[#allocation7 + $0x38] sm:$0xf]
    %v94 = vld [vmem:[#allocation7 + $0x3c] sm:$0xf]
    %v95 = vld [vmem:[%s3] sm:$0x1]
    %v97 = vlaneseq
    %v98 = vshrl.u32 %v97, 7
    %v99 = vsub.s32 0, %v98
    %v100 = vrot.slane %v95, %v99
    %v118 = vunpack.c.l.b16 %v79
    %v119 = vunpack.c.l.b16 %v80
    %v120 = vunpack.c.l.b16 %v81
    %v121 = vunpack.c.l.b16 %v82
    %v122 = vunpack.c.l.b16 %v83
    %v123 = vunpack.c.l.b16 %v84
    %v124 = vunpack.c.l.b16 %v85
    %v125 = vunpack.c.l.b16 %v86
    %v126 = vunpack.c.l.b16 %v87
    %v127 = vunpack.c.l.b16 %v88
    %v128 = vunpack.c.l.b16 %v89
    %v129 = vunpack.c.l.b16 %v90
    %v130 = vunpack.c.l.b16 %v91
    %v131 = vunpack.c.l.b16 %v92
    %v132 = vunpack.c.l.b16 %v93
    %v133 = vunpack.c.l.b16 %v94
    %v134 = vpack.c.b16 %v119, %v118
    %v135 = vpack.c.b16 %v121, %v120
    %v136 = vpack.c.b16 %v123, %v122
    %v137 = vpack.c.b16 %v125, %v124
    %v138 = vpack.c.b16 %v127, %v126
    %v139 = vpack.c.b16 %v129, %v128
    %v140 = vpack.c.b16 %v131, %v130
    %v141 = vpack.c.b16 %v133, %v132
    %150 = vmatprep.subr.bf16.mxu0 0
    %151 = vmatpush1.bf16.msra.mxu0 %v141
    %152 = vmatprep.subr.bf16.mxu0 0
    %153 = vmatpush1.bf16.msra.mxu0 %v140
    %154 = vmatprep.subr.bf16.mxu0 0
    %155 = vmatpush1.bf16.msra.mxu0 %v139
    %156 = vmatprep.subr.bf16.mxu0 0
    %157 = vmatpush1.bf16.msra.mxu0 %v138
    %158 = vmatprep.subr.bf16.mxu0 0
    %159 = vmatpush1.bf16.msra.mxu0 %v137
    %160 = vmatprep.subr.bf16.mxu0 0
    %161 = vmatpush1.bf16.msra.mxu0 %v136
    %162 = vmatprep.subr.bf16.mxu0 0
    %163 = vmatpush1.bf16.msra.mxu0 %v135
    %164 = vmatprep.subr.bf16.mxu0 0
    %165 = vmatpush1.bf16.msra.mxu0 %v134
    %166 = vmatprep.subr.bf16.mxu0 0
    %167 = vmatpush2.bf16.msra.mxu0 0
    %168 = vmatprep.subr.bf16.mxu0 0
    %169 = vmatpush2.bf16.msra.mxu0 0
    %170 = vmatprep.subr.bf16.mxu0 0
    %171 = vmatpush2.bf16.msra.mxu0 0
    %172 = vmatprep.subr.bf16.mxu0 0
    %173 = vmatpush2.bf16.msra.mxu0 0
    %174 = vmatprep.subr.bf16.mxu0 0
    %175 = vmatpush2.bf16.msra.mxu0 0
    %176 = vmatprep.subr.bf16.mxu0 0
    %177 = vmatpush2.bf16.msra.mxu0 0
    %178 = vmatprep.subr.bf16.mxu0 0
    %179 = vmatpush2.bf16.msra.mxu0 0
    %180 = vmatprep.subr.bf16.mxu0 0
    %181 = vmatpush2.bf16.msra.mxu0 0
    %182 = vmatprep.mubr.bf16.mxu0 0
    %183 = vmatmul.mubr.bf16.gmra.mxu0 %v78
    %v184 = vpop.f32.mrf.mxu0
    %v185 = vadd.f32 %v100, %v184
    %v186 = vpop.f32.mrf.mxu0
    %v187 = vpop.f32.mrf.mxu0
    %v188 = vpop.f32.mrf.mxu0
    %189 = vdwg.mxu0
    %v190 = vld [vmem:[#allocation5] sm:$0xf]
    %191 = vmatprep.subr.bf16.mxu0 0
    %192 = vmatpush1.bf16.msra.mxu0 %v141
    %193 = vmatprep.subr.bf16.mxu0 0
    %194 = vmatpush1.bf16.msra.mxu0 %v140
    %195 = vmatprep.subr.bf16.mxu0 0
    %196 = vmatpush1.bf16.msra.mxu0 %v139
    %197 = vmatprep.subr.bf16.mxu0 0
    %198 = vmatpush1.bf16.msra.mxu0 %v138
    %199 = vmatprep.subr.bf16.mxu0 0
    %200 = vmatpush1.bf16.msra.mxu0 %v137
    %201 = vmatprep.subr.bf16.mxu0 0
    %202 = vmatpush1.bf16.msra.mxu0 %v136
    %203 = vmatprep.subr.bf16.mxu0 0
    %204 = vmatpush1.bf16.msra.mxu0 %v135
    %205 = vmatprep.subr.bf16.mxu0 0
    %206 = vmatpush1.bf16.msra.mxu0 %v134
    %207 = vmatprep.subr.bf16.mxu0 0
    %208 = vmatpush2.bf16.msra.mxu0 0
    %209 = vmatprep.subr.bf16.mxu0 0
    %210 = vmatpush2.bf16.msra.mxu0 0
    %211 = vmatprep.subr.bf16.mxu0 0
    %212 = vmatpush2.bf16.msra.mxu0 0
    %213 = vmatprep.subr.bf16.mxu0 0
    %214 = vmatpush2.bf16.msra.mxu0 0
    %215 = vmatprep.subr.bf16.mxu0 0
    %216 = vmatpush2.bf16.msra.mxu0 0
    %217 = vmatprep.subr.bf16.mxu0 0
    %218 = vmatpush2.bf16.msra.mxu0 0
    %219 = vmatprep.subr.bf16.mxu0 0
    %220 = vmatpush2.bf16.msra.mxu0 0
    %221 = vmatprep.subr.bf16.mxu0 0
    %222 = vmatpush2.bf16.msra.mxu0 0
    %223 = vmatprep.mubr.bf16.mxu0 0
    %224 = vmatmul.mubr.bf16.gmra.mxu0 %v190
    %v225 = vpop.f32.mrf.mxu0
    %v226 = vadd.f32 %v100, %v225
    %v227 = vpop.f32.mrf.mxu0
    %v228 = vpop.f32.mrf.mxu0
    %v229 = vpop.f32.mrf.mxu0
    %230 = vdwg.mxu0
    %v231 = vld [vmem:[#allocation2] sm:$0xf]
    %v232 = vpack.c.bf16 %v226, %v226
    %vm233 = vcmask 64512
    %v235 = vsel %vm233, %v231, 0
    %vm237 = vcmask 1043456
    %v239 = vsel %vm237, %v232, 0
    %241 = vmatprep.subr.bf16.mxu0 0
    %242 = vmatpush1.bf16.msra.mxu0 0
    %243 = vmatprep.subr.bf16.mxu0 0
    %244 = vmatpush1.bf16.msra.mxu0 0
    %245 = vmatprep.subr.bf16.mxu0 0
    %246 = vmatpush1.bf16.msra.mxu0 0
    %247 = vmatprep.subr.bf16.mxu0 0
    %248 = vmatpush1.bf16.msra.mxu0 0
    %249 = vmatprep.subr.bf16.mxu0 0
    %250 = vmatpush1.bf16.msra.mxu0 0
    %251 = vmatprep.subr.bf16.mxu0 0
    %252 = vmatpush1.bf16.msra.mxu0 0
    %253 = vmatprep.subr.bf16.mxu0 0
    %254 = vmatpush1.bf16.msra.mxu0 0
    %255 = vmatprep.subr.bf16.mxu0 0
    %256 = vmatpush1.bf16.msra.mxu0 %v239
    %257 = vmatprep.subr.bf16.mxu0 0
    %258 = vmatpush2.bf16.msra.mxu0 0
    %259 = vmatprep.subr.bf16.mxu0 0
    %260 = vmatpush2.bf16.msra.mxu0 0
    %261 = vmatprep.subr.bf16.mxu0 0
    %262 = vmatpush2.bf16.msra.mxu0 0
    %263 = vmatprep.subr.bf16.mxu0 0
    %264 = vmatpush2.bf16.msra.mxu0 0
    %265 = vmatprep.subr.bf16.mxu0 0
    %266 = vmatpush2.bf16.msra.mxu0 0
    %267 = vmatprep.subr.bf16.mxu0 0
    %268 = vmatpush2.bf16.msra.mxu0 0
    %269 = vmatprep.subr.bf16.mxu0 0
    %270 = vmatpush2.bf16.msra.mxu0 0
    %271 = vmatprep.subr.bf16.mxu0 0
    %272 = vmatpush2.bf16.msra.mxu0 0
    %273 = vmatprep.mubr.bf16.mxu0 0
    %274 = vmatmul.mubr.bf16.gmra.mxu0 %v235
    %v275 = vpop.f32.mrf.mxu0
    %v276 = vadd.f32 0.0, %v275
    %v277 = vpop.f32.mrf.mxu0
    %v278 = vpop.f32.mrf.mxu0
    %v279 = vpop.f32.mrf.mxu0
    %280 = vdwg.mxu0
    %v281 = vpack.c.bf16 %v276, %v276
    %v282 = vld [vmem:[#allocation8] sm:$0xf]
    %v283 = vld [vmem:[#allocation8 + $0x4] sm:$0xf]
    %v284 = vld [vmem:[#allocation8 + $0x8] sm:$0xf]
    %v285 = vld [vmem:[#allocation8 + $0xc] sm:$0xf]
    %v286 = vld [vmem:[#allocation8 + $0x10] sm:$0xf]
    %v287 = vld [vmem:[#allocation8 + $0x14] sm:$0xf]
    %v288 = vld [vmem:[#allocation8 + $0x18] sm:$0xf]
    %v289 = vld [vmem:[#allocation8 + $0x1c] sm:$0xf]
    %v290 = vld [vmem:[#allocation8 + $0x20] sm:$0xf]
    %v291 = vld [vmem:[#allocation8 + $0x24] sm:$0xf]
    %v292 = vld [vmem:[#allocation8 + $0x28] sm:$0xf]
    %v293 = vld [vmem:[#allocation8 + $0x2c] sm:$0xf]
    %v294 = vld [vmem:[#allocation8 + $0x30] sm:$0xf]
    %v295 = vld [vmem:[#allocation8 + $0x34] sm:$0xf]
    %v296 = vld [vmem:[#allocation8 + $0x38] sm:$0xf]
    %v297 = vld [vmem:[#allocation8 + $0x3c] sm:$0xf]
    %v314 = vunpack.c.l.b16 %v282
    %v315 = vunpack.c.l.b16 %v283
    %v316 = vunpack.c.l.b16 %v284
    %v317 = vunpack.c.l.b16 %v285
    %v318 = vunpack.c.l.b16 %v286
    %v319 = vunpack.c.l.b16 %v287
    %v320 = vunpack.c.l.b16 %v288
    %v321 = vunpack.c.l.b16 %v289
    %v322 = vunpack.c.l.b16 %v290
    %v323 = vunpack.c.l.b16 %v291
    %v324 = vunpack.c.l.b16 %v292
    %v325 = vunpack.c.l.b16 %v293
    %v326 = vunpack.c.l.b16 %v294
    %v327 = vunpack.c.l.b16 %v295
    %v328 = vunpack.c.l.b16 %v296
    %v329 = vunpack.c.l.b16 %v297
    %v330 = vpack.c.b16 %v315, %v314
    %v331 = vpack.c.b16 %v317, %v316
    %v332 = vpack.c.b16 %v319, %v318
    %v333 = vpack.c.b16 %v321, %v320
    %v334 = vpack.c.b16 %v323, %v322
    %v335 = vpack.c.b16 %v325, %v324
    %v336 = vpack.c.b16 %v327, %v326
    %v337 = vpack.c.b16 %v329, %v328
    %346 = vmatprep.subr.bf16.mxu0 0
    %347 = vmatpush1.bf16.msra.mxu0 %v337
    %348 = vmatprep.subr.bf16.mxu0 0
    %349 = vmatpush1.bf16.msra.mxu0 %v336
    %350 = vmatprep.subr.bf16.mxu0 0
    %351 = vmatpush1.bf16.msra.mxu0 %v335
    %352 = vmatprep.subr.bf16.mxu0 0
    %353 = vmatpush1.bf16.msra.mxu0 %v334
    %354 = vmatprep.subr.bf16.mxu0 0
    %355 = vmatpush1.bf16.msra.mxu0 %v333
    %356 = vmatprep.subr.bf16.mxu0 0
    %357 = vmatpush1.bf16.msra.mxu0 %v332
    %358 = vmatprep.subr.bf16.mxu0 0
    %359 = vmatpush1.bf16.msra.mxu0 %v331
    %360 = vmatprep.subr.bf16.mxu0 0
    %361 = vmatpush1.bf16.msra.mxu0 %v330
    %362 = vmatprep.subr.bf16.mxu0 0
    %363 = vmatpush2.bf16.msra.mxu0 0
    %364 = vmatprep.subr.bf16.mxu0 0
    %365 = vmatpush2.bf16.msra.mxu0 0
    %366 = vmatprep.subr.bf16.mxu0 0
    %367 = vmatpush2.bf16.msra.mxu0 0
    %368 = vmatprep.subr.bf16.mxu0 0
    %369 = vmatpush2.bf16.msra.mxu0 0
    %370 = vmatprep.subr.bf16.mxu0 0
    %371 = vmatpush2.bf16.msra.mxu0 0
    %372 = vmatprep.subr.bf16.mxu0 0
    %373 = vmatpush2.bf16.msra.mxu0 0
    %374 = vmatprep.subr.bf16.mxu0 0
    %375 = vmatpush2.bf16.msra.mxu0 0
    %376 = vmatprep.subr.bf16.mxu0 0
    %377 = vmatpush2.bf16.msra.mxu0 0
    %378 = vmatprep.mubr.bf16.mxu0 0
    %379 = vmatmul.mubr.bf16.gmra.mxu0 %v281
    %v380 = vpop.f32.mrf.mxu0
    %v381 = vadd.f32 0.0, %v380
    %v382 = vpop.f32.mrf.mxu0
    %v383 = vpop.f32.mrf.mxu0
    %v384 = vpop.f32.mrf.mxu0
    %385 = vdwg.mxu0
    %v386 = vadd.f32 %v185, %v381
    %v387 = vmax.f32 %v386, 0.0
    %v388 = vadd.f32 %v387, %v185
    %389 = vst [vmem:[#allocation10] sm:$0xff] %v388
    // Predicated region
    $region38: #{tpu_custom_call.1} parent=1 // pred_check
      _
    $region39: #{tpu_custom_call.1} parent=1 // pred_check_branch
      %391 = sbr.rel (0) target = $region41
    $region40: #{tpu_custom_call.1} parent=1 // pred_region
      %s393 = ssub.s32 128, 128
      %394 = vsyncadd [#allocation4], %s393
      %s396 = sshll.u32 [#allocation10], 4
      %s397 = int_to_ptr.vmem [resolvable:$true] %s396
      %399 = dma.vmem_to_hbm [thread:$0]  %s397, 128, %s5, [#allocation4]
    $region41: #{tpu_custom_call.1} parent=1 // pred_fallthru
      _
    // Predicated region
    $region42: #{tpu_custom_call.1} parent=1 // pred_check
      _
    $region43: #{tpu_custom_call.1} parent=1 // pred_check_branch
      %401 = sbr.rel (0) target = $region45
    $region44: #{tpu_custom_call.1} parent=1 // pred_region
      %402 = dma.done [#allocation4], 128
    $region45: #{tpu_custom_call.1} parent=1 // pred_fallthru
      _
    %403 = vsyncpa [#allocation3], 1
    %404 = vsyncpa [#allocation6], 1
    %405 = vsyncpa [#allocation9], 1
    %406 = vsyncpa [#allocation4], 1

</llo_original>
